<compile_context>
chip_gen: v7x
topology: tpu7x:2x2x1
jax: 0.10.0
libtpu: 0.0.40
codegen_flags: <defaults>
</compile_context>

<pallas_src>
import jax
import jax.numpy as jnp
from jax.experimental import pallas as pl
from jax.experimental.pallas import tpu as pltpu

_NEG_BIG = -1e30  # f32 bias for padded logit columns -> exp underflows to 0.


def _round_up(x, m):
    return ((x + m - 1) // m) * m


def a2c_actor_kernel(x_ref, w1_ref, b1_ref, w2_ref, b2_ref, w3_ref, b3_ref,
                     o_ref):
    """Fused 3-layer MLP + stable softmax on one (tile_b, *) batch tile."""

    def mm(a, w_ref):
        # MXU matmul; inputs in the weights' dtype (f32 or bf16), f32 accum.
        # x is already cast on the host, so a.astype is a no-op for layer 1.
        return jnp.dot(a.astype(w_ref.dtype), w_ref[...],
                       preferred_element_type=jnp.float32)

    # Layer 1 / 2: Linear + ReLU (bias adds, ReLU, softmax all in f32).
    h1 = jnp.maximum(mm(x_ref[...], w1_ref) + b1_ref[...], 0.0)
    h2 = jnp.maximum(mm(h1, w2_ref) + b2_ref[...], 0.0)

    # Output head: Linear + numerically-stable softmax over the last dim.
    # Padded logit columns carry a -1e30 f32 bias -> exp() == 0 exactly, so
    # the softmax over the real columns is exact.
    logits = mm(h2, w3_ref) + b3_ref[...]
    m = jnp.max(logits, axis=-1, keepdims=True)
    e = jnp.exp(logits - m)
    denom = jnp.sum(e, axis=-1, keepdims=True)
    # Exact divide (one VPU op per tile): rows sum to 1 to f32 precision.
    o_ref[...] = (e / denom).astype(o_ref.dtype)


def _resident_spec(shape):
    """BlockSpec for a weight/bias operand.

    Constant block index keeps it VMEM-resident across all grid steps (no
    per-tile re-DMA).  Single-buffer it when the installed jax supports
    pipeline_mode (the second pipeline buffer is dead weight for a constant
    operand; on v7x's 64 MiB VMEM this is what keeps large hidden_dims
    viable).  Falls back to default buffering otherwise.
    """
    index_map = lambda i: (0, 0)
    try:
        return pl.BlockSpec(shape, index_map, pipeline_mode=pl.Buffered(1))
    except (AttributeError, TypeError, ValueError):
        return pl.BlockSpec(shape, index_map)


def pad_params(params, *, lane=128, matmul_dtype=jnp.float32):
    """One-time layout transform: pad hidden/output dims to lane width (128).

    Zero-padding of weight rows/cols and biases is semantics-preserving
    (padded hidden units are ReLU(0)=0 and contribute nothing); padded logit
    columns get a -1e30 bias so softmax assigns them exactly 0 probability.
    Weights may be stored in bf16 (halves weight DMA bytes; the MXU is
    bf16-native on v5e, v6e and v7x).  Biases MUST stay f32 so the -1e30
    padded-logit bias remains finite.
    """
    in_dim, hidden = params["w1"].shape
    out_dim = params["w3"].shape[1]
    h_pad = _round_up(max(hidden, lane), lane)
    out_pad = _round_up(max(out_dim, lane), lane)

    def pad(x, shape, fill=0.0):
        widths = [(0, t - s) for s, t in zip(x.shape, shape)]
        return jnp.pad(x, widths, constant_values=fill)

    return {
        "w1": pad(params["w1"], (in_dim, h_pad)).astype(matmul_dtype),
        "b1": pad(params["b1"], (1, h_pad)),
        "w2": pad(params["w2"], (h_pad, h_pad)).astype(matmul_dtype),
        "b2": pad(params["b2"], (1, h_pad)),
        "w3": pad(params["w3"], (h_pad, out_pad)).astype(matmul_dtype),
        "b3": pad(params["b3"], (1, out_pad), fill=_NEG_BIG),
    }


def a2c_actor_forward(state, padded_params, *, tile_b=None,
                      out_dtype=jnp.float32):
    """Run the fused actor forward pass.

    state: (B, input_dim) f32.  padded_params: output of pad_params().
    Returns a (B, out_pad) buffer: columns [0, out_dim) hold the softmax
    probabilities, padded columns are exactly 0 (so full-row sums are 1).
    Callers index the real columns; no post-kernel slice/HBM pass is done
    here.  For large rollouts pass out_dtype=jnp.bfloat16 to halve output
    write traffic.
    """
    B, in_dim = state.shape
    h_pad = padded_params["w1"].shape[1]
    out_pad = padded_params["w3"].shape[1]
    matmul_dtype = padded_params["w1"].dtype

    # Host-side cast (no-op for f32): halves x HBM->VMEM DMA on the bf16 path
    # and removes a per-tile VPU cast inside the kernel.
    state = state.astype(matmul_dtype)

    # One big tile when the batch fits (<=1024 rows), else 512-row tiles:
    # 128-row tiles are per-step-overhead bound for this tiny per-tile
    # compute.  VMEM cost of a 1024-row tile is ~1.2 MB -- far under the
    # scoped default on every generation, including v7x.
    if tile_b is None:
        tile_b = min(_round_up(B, 8), 1024) if B <= 1024 else 512

    b_pad = _round_up(B, tile_b)
    if b_pad != B:
        # Fallback only (ragged batch): common path has no host-side pad.
        state = jnp.pad(state, ((0, b_pad - B), (0, 0)))
    num_tiles = b_pad // tile_b

    # Only ask for the v7x 2-TC split when there are enough tiles to amortize
    # the duplicated weight DMA; no-op on v5e/v6e (1 TC).
    dim_sem = ("parallel",) if num_tiles >= 4 else ("arbitrary",)

    out = pl.pallas_call(
        a2c_actor_kernel,
        out_shape=jax.ShapeDtypeStruct((b_pad, out_pad), out_dtype),
        grid_spec=pltpu.PrefetchScalarGridSpec(
            num_scalar_prefetch=0,
            grid=(num_tiles,),
            in_specs=[
                # batch tile of states
                pl.BlockSpec((tile_b, in_dim), lambda i: (i, 0)),
                # weights / biases: VMEM-resident, single-buffered
                _resident_spec((in_dim, h_pad)),
                _resident_spec((1, h_pad)),
                _resident_spec((h_pad, h_pad)),
                _resident_spec((1, h_pad)),
                _resident_spec((h_pad, out_pad)),
                _resident_spec((1, out_pad)),
            ],
            out_specs=pl.BlockSpec((tile_b, out_pad), lambda i: (i, 0)),
        ),
        compiler_params=pltpu.CompilerParams(dimension_semantics=dim_sem),
    )(state,
      padded_params["w1"], padded_params["b1"],
      padded_params["w2"], padded_params["b2"],
      padded_params["w3"], padded_params["b3"])

    if b_pad != B:
        out = out[:B]
    return out


def xavier_uniform(key, fan_in, fan_out):
    """Matches torch.nn.init.xavier_uniform_ for a Linear weight of shape
    (out, in), returned already transposed to (in, out)."""
    bound = (6.0 / (fan_in + fan_out)) ** 0.5
    return jax.random.uniform(key, (fan_in, fan_out), jnp.float32, -bound, bound)


def init_params(key, input_dim, hidden_dim, output_dim):
    k1, k2, k3 = jax.random.split(key, 3)
    return {
        "w1": xavier_uniform(k1, input_dim, hidden_dim),
        "b1": jnp.zeros((1, hidden_dim), jnp.float32),
        "w2": xavier_uniform(k2, hidden_dim, hidden_dim),
        "b2": jnp.zeros((1, hidden_dim), jnp.float32),
        "w3": xavier_uniform(k3, hidden_dim, output_dim),
        "b3": jnp.zeros((1, output_dim), jnp.float32),
    }


def reference_forward(state, params):
    """Pure-JAX f32 reference of the same forward pass (sanity check)."""
    h1 = jnp.maximum(state @ params["w1"] + params["b1"], 0.0)
    h2 = jnp.maximum(h1 @ params["w2"] + params["b2"], 0.0)
    logits = h2 @ params["w3"] + params["b3"]
    return jax.nn.softmax(logits, axis=-1)


if __name__ == "__main__":
    # Module-consistent small shapes: state dim 16, hidden 32, 4 actions,
    # batch 64 (multiple of 8 -> no host pad, single 64-row tile).
    B, INPUT_DIM, HIDDEN_DIM, OUTPUT_DIM = 64, 16, 32, 4

    key = jax.random.PRNGKey(0)
    k_state, k_params = jax.random.split(key)

    state = jax.random.normal(k_state, (B, INPUT_DIM), jnp.float32)
    params = init_params(k_params, INPUT_DIM, HIDDEN_DIM, OUTPUT_DIM)
    ref = reference_forward(state, params)

    # f32 matmul path.
    pparams_f32 = pad_params(params, matmul_dtype=jnp.float32)
    probs = a2c_actor_forward(state, pparams_f32)
    probs = jax.block_until_ready(probs)
    assert probs.shape == (B, 128)
    assert jnp.allclose(probs[:, :OUTPUT_DIM], ref, atol=2e-3, rtol=2e-3)
    # Padded columns are exactly 0, so full-row sums equal the real-column
    # sums; with the exact divide they hit 1 to f32 precision.
    assert jnp.all(probs[:, OUTPUT_DIM:] == 0.0)
    assert jnp.allclose(jnp.sum(probs, axis=-1), 1.0, atol=1e-5)

    # bf16 matmul-input path (bf16 MXU inputs on v5e/v6e/v7x; f32 accumulate,
    # bias adds and softmax stay f32).
    pparams_bf16 = pad_params(params, matmul_dtype=jnp.bfloat16)
    probs_bf16 = a2c_actor_forward(state, pparams_bf16)
    probs_bf16 = jax.block_until_ready(probs_bf16)
    assert probs_bf16.shape == (B, 128)
    assert jnp.allclose(probs_bf16[:, :OUTPUT_DIM], ref, atol=3e-2, rtol=3e-2)
    assert jnp.allclose(jnp.sum(probs_bf16, axis=-1), 1.0, atol=1e-5)

    print("KERNEL_OK")
</pallas_src>

<mosaic_0001>
module attributes {stable_mosaic.version = 11 : i64} {
  func.func @a2c_actor_kernel(%arg0: i32, %arg1: memref<64x16xf32, #tpu.memory_space<vmem>>, %arg2: memref<16x128xf32, #tpu.memory_space<vmem>>, %arg3: memref<1x128xf32, #tpu.memory_space<vmem>>, %arg4: memref<128x128xf32, #tpu.memory_space<vmem>>, %arg5: memref<1x128xf32, #tpu.memory_space<vmem>>, %arg6: memref<128x128xf32, #tpu.memory_space<vmem>>, %arg7: memref<1x128xf32, #tpu.memory_space<vmem>>, %arg8: memref<64x128xf32, #tpu.memory_space<vmem>>) attributes {dimension_semantics = [#tpu.dimension_semantics<arbitrary>], iteration_bounds = array<i64: 1>, scalar_prefetch = 0 : i64, scratch_operands = 0 : i64, tpu.core_type = #tpu.core_type<tc>, window_params = [{transform_indices = @transform_0, window_bounds = array<i64: 64, 16>}, {pipeline_mode = #tpu.pipeline_mode<synchronous>, transform_indices = @transform_1, window_bounds = array<i64: 16, 128>}, {pipeline_mode = #tpu.pipeline_mode<synchronous>, transform_indices = @transform_2, window_bounds = array<i64: 1, 128>}, {pipeline_mode = #tpu.pipeline_mode<synchronous>, transform_indices = @transform_3, window_bounds = array<i64: 128, 128>}, {pipeline_mode = #tpu.pipeline_mode<synchronous>, transform_indices = @transform_4, window_bounds = array<i64: 1, 128>}, {pipeline_mode = #tpu.pipeline_mode<synchronous>, transform_indices = @transform_5, window_bounds = array<i64: 128, 128>}, {pipeline_mode = #tpu.pipeline_mode<synchronous>, transform_indices = @transform_6, window_bounds = array<i64: 1, 128>}, {transform_indices = @transform_7, window_bounds = array<i64: 64, 128>}]} {
    %c0 = arith.constant 0 : index
    %c0_0 = arith.constant 0 : index
    %0 = vector.load %arg1[%c0, %c0_0] : memref<64x16xf32, #tpu.memory_space<vmem>>, vector<64x16xf32>
    %c0_1 = arith.constant 0 : index
    %c0_2 = arith.constant 0 : index
    %1 = vector.load %arg2[%c0_1, %c0_2] : memref<16x128xf32, #tpu.memory_space<vmem>>, vector<16x128xf32>
    %cst = arith.constant dense<0.000000e+00> : vector<64x128xf32>
    %2 = tpu.matmul %0, %1, %cst {dimension_numbers = #tpu.dot_dimension_numbers<[1], [0], [0], [1], [0, 0, 1, 1], [], []>} : vector<64x16xf32>, vector<16x128xf32>, vector<64x128xf32> -> vector<64x128xf32>
    %c0_3 = arith.constant 0 : index
    %c0_4 = arith.constant 0 : index
    %3 = vector.load %arg3[%c0_3, %c0_4] : memref<1x128xf32, #tpu.memory_space<vmem>>, vector<1x128xf32>
    %4 = vector.broadcast %3 : vector<1x128xf32> to vector<64x128xf32>
    %5 = arith.addf %2, %4 : vector<64x128xf32>
    %cst_5 = arith.constant 0.000000e+00 : f32
    %6 = vector.broadcast %cst_5 : f32 to vector<64x128xf32>
    %7 = arith.maximumf %5, %6 : vector<64x128xf32>
    %c0_6 = arith.constant 0 : index
    %c0_7 = arith.constant 0 : index
    %8 = vector.load %arg4[%c0_6, %c0_7] : memref<128x128xf32, #tpu.memory_space<vmem>>, vector<128x128xf32>
    %cst_8 = arith.constant dense<0.000000e+00> : vector<64x128xf32>
    %9 = tpu.matmul %7, %8, %cst_8 {dimension_numbers = #tpu.dot_dimension_numbers<[1], [0], [0], [1], [0, 0, 1, 1], [], []>} : vector<64x128xf32>, vector<128x128xf32>, vector<64x128xf32> -> vector<64x128xf32>
    %c0_9 = arith.constant 0 : index
    %c0_10 = arith.constant 0 : index
    %10 = vector.load %arg5[%c0_9, %c0_10] : memref<1x128xf32, #tpu.memory_space<vmem>>, vector<1x128xf32>
    %11 = vector.broadcast %10 : vector<1x128xf32> to vector<64x128xf32>
    %12 = arith.addf %9, %11 : vector<64x128xf32>
    %cst_11 = arith.constant 0.000000e+00 : f32
    %13 = vector.broadcast %cst_11 : f32 to vector<64x128xf32>
    %14 = arith.maximumf %12, %13 : vector<64x128xf32>
    %c0_12 = arith.constant 0 : index
    %c0_13 = arith.constant 0 : index
    %15 = vector.load %arg6[%c0_12, %c0_13] : memref<128x128xf32, #tpu.memory_space<vmem>>, vector<128x128xf32>
    %cst_14 = arith.constant dense<0.000000e+00> : vector<64x128xf32>
    %16 = tpu.matmul %14, %15, %cst_14 {dimension_numbers = #tpu.dot_dimension_numbers<[1], [0], [0], [1], [0, 0, 1, 1], [], []>} : vector<64x128xf32>, vector<128x128xf32>, vector<64x128xf32> -> vector<64x128xf32>
    %c0_15 = arith.constant 0 : index
    %c0_16 = arith.constant 0 : index
    %17 = vector.load %arg7[%c0_15, %c0_16] : memref<1x128xf32, #tpu.memory_space<vmem>>, vector<1x128xf32>
    %18 = vector.broadcast %17 : vector<1x128xf32> to vector<64x128xf32>
    %19 = arith.addf %16, %18 : vector<64x128xf32>
    %cst_17 = arith.constant dense<0xFF800000> : vector<64xf32>
    %20 = vector.multi_reduction <maximumf>, %19, %cst_17 [1] : vector<64x128xf32> to vector<64xf32>
    %21 = vector.shape_cast %20 : vector<64xf32> to vector<64x1xf32>
    %22 = vector.broadcast %21 : vector<64x1xf32> to vector<64x128xf32>
    %23 = arith.subf %19, %22 : vector<64x128xf32>
    %24 = math.exp %23 : vector<64x128xf32>
    %cst_18 = arith.constant dense<0.000000e+00> : vector<64xf32>
    %25 = vector.multi_reduction <add>, %24, %cst_18 [1] : vector<64x128xf32> to vector<64xf32>
    %26 = vector.shape_cast %25 : vector<64xf32> to vector<64x1xf32>
    %27 = vector.broadcast %26 : vector<64x1xf32> to vector<64x128xf32>
    %28 = arith.divf %24, %27 : vector<64x128xf32>
    %c0_19 = arith.constant 0 : index
    %c0_20 = arith.constant 0 : index
    %29 = vector.load %arg8[%c0_19, %c0_20] : memref<64x128xf32, #tpu.memory_space<vmem>>, vector<64x128xf32>
    tpu.vector_store %arg8[%c0_19, %c0_20], %28 {strides = array<i32>} : memref<64x128xf32, #tpu.memory_space<vmem>>, vector<64x128xf32>,
    return
  }
  func.func @transform_0(%arg0: i32) -> (i32, i32) {
    %c0_i32 = arith.constant 0 : i32
    %c0_i32_0 = arith.constant 0 : i32
    return %arg0, %c0_i32 : i32, i32
  }
  func.func @transform_1(%arg0: i32) -> (i32, i32) {
    %c0_i32 = arith.constant 0 : i32
    %c0_i32_0 = arith.constant 0 : i32
    %c0_i32_1 = arith.constant 0 : i32
    return %c0_i32, %c0_i32_0 : i32, i32
  }
  func.func @transform_2(%arg0: i32) -> (i32, i32) {
    %c0_i32 = arith.constant 0 : i32
    %c0_i32_0 = arith.constant 0 : i32
    %c0_i32_1 = arith.constant 0 : i32
    return %c0_i32, %c0_i32_0 : i32, i32
  }
  func.func @transform_3(%arg0: i32) -> (i32, i32) {
    %c0_i32 = arith.constant 0 : i32
    %c0_i32_0 = arith.constant 0 : i32
    %c0_i32_1 = arith.constant 0 : i32
    return %c0_i32, %c0_i32_0 : i32, i32
  }
  func.func @transform_4(%arg0: i32) -> (i32, i32) {
    %c0_i32 = arith.constant 0 : i32
    %c0_i32_0 = arith.constant 0 : i32
    %c0_i32_1 = arith.constant 0 : i32
    return %c0_i32, %c0_i32_0 : i32, i32
  }
  func.func @transform_5(%arg0: i32) -> (i32, i32) {
    %c0_i32 = arith.constant 0 : i32
    %c0_i32_0 = arith.constant 0 : i32
    %c0_i32_1 = arith.constant 0 : i32
    return %c0_i32, %c0_i32_0 : i32, i32
  }
  func.func @transform_6(%arg0: i32) -> (i32, i32) {
    %c0_i32 = arith.constant 0 : i32
    %c0_i32_0 = arith.constant 0 : i32
    %c0_i32_1 = arith.constant 0 : i32
    return %c0_i32, %c0_i32_0 : i32, i32
  }
  func.func @transform_7(%arg0: i32) -> (i32, i32) {
    %c0_i32 = arith.constant 0 : i32
    %c0_i32_0 = arith.constant 0 : i32
    return %arg0, %c0_i32 : i32, i32
  }
}

</mosaic_0001>

<llo_original>
// kernel: tpu_custom_call.1
$region0: #{tpu_custom_call.1}
  #allocation0 [shape = 'u32[]', space=smem, size = 0x4, offset = 0x4, fixed_abs, tag = 'smem constant byte address 0x4 - core index']
  #allocation1 [shape = 'u32[144,128]{1,0:T(1,128)}', space=vmem, size = 0x12000, scoped, tag = 'internal scratch']
  %s0 = inlined_call_operand.vmem [shape: f32[64,16], index: 0, kind: input, shape index: {}]
  %s1 = inlined_call_operand.vmem [shape: f32[16,128], index: 1, kind: input, shape index: {}]
  %s2 = inlined_call_operand.vmem [shape: f32[1,128], index: 2, kind: input, shape index: {}]
  %s3 = inlined_call_operand.hbm [shape: f32[128,128], index: 3, kind: input, shape index: {}]
  %s4 = inlined_call_operand.vmem [shape: f32[1,128], index: 4, kind: input, shape index: {}]
  %s5 = inlined_call_operand.hbm [shape: f32[128,128], index: 5, kind: input, shape index: {}]
  %s6 = inlined_call_operand.vmem [shape: f32[1,128], index: 6, kind: input, shape index: {}]
  %s7 = inlined_call_operand.hbm [shape: f32[64,128], index: 7, kind: output, shape index: {}]
  %s8 = sld [smem:[#allocation0]]
  $region46: #{tpu_custom_call.1} parent=0
    _
  %s10 = ssub.s32 1, %s8
  %s11 = scalar_select 0, %s10, %s8
  $region1: #{tpu_custom_call.1} parent=0
    #allocation2 [shape = 'u8[65536]{0}', space=vmem, size = 0x10000, scoped, tag = 'input window, operand 3, single buffered']
    #allocation3 [shape = 's32[1]{0}', space=sflag, size = 0x4, scoped, tag = 'scoped memory for tpu_custom_call.1']
    #allocation4 [shape = 's32[1]{0}', space=sflag, size = 0x4, scoped, tag = 'scoped memory for tpu_custom_call.1']
    #allocation5 [shape = 'u8[65536]{0}', space=vmem, size = 0x10000, scoped, tag = 'input window, operand 5, single buffered']
    #allocation6 [shape = 's32[1]{0}', space=sflag, size = 0x4, scoped, tag = 'scoped memory for tpu_custom_call.1']
    #allocation7 [shape = 'u8[32768]{0}', space=vmem, size = 0x8000, scoped, tag = 'output window, operand 0, single buffered']
    %12 = vsyncpa [#allocation3], 0
    %13 = vsyncpa [#allocation6], 0
    %14 = vsyncpa [#allocation4], 0
    // Predicated region
    $region2: #{tpu_custom_call.1} parent=1 // pred_check
      _
    $region3: #{tpu_custom_call.1} parent=1 // pred_check_branch
      %16 = sbr.rel (0) target = $region5
    $region4: #{tpu_custom_call.1} parent=1 // pred_region
      _
    $region5: #{tpu_custom_call.1} parent=1 // pred_fallthru
      _
    // Predicated region
    $region6: #{tpu_custom_call.1} parent=1 // pred_check
      _
    $region7: #{tpu_custom_call.1} parent=1 // pred_check_branch
      %18 = sbr.rel (0) target = $region9
    $region8: #{tpu_custom_call.1} parent=1 // pred_region
      _
    $region9: #{tpu_custom_call.1} parent=1 // pred_fallthru
      _
    // Predicated region
    $region10: #{tpu_custom_call.1} parent=1 // pred_check
      _
    $region11: #{tpu_custom_call.1} parent=1 // pred_check_branch
      %20 = sbr.rel (0) target = $region13
    $region12: #{tpu_custom_call.1} parent=1 // pred_region
      _
    $region13: #{tpu_custom_call.1} parent=1 // pred_fallthru
      _
    // Predicated region
    $region14: #{tpu_custom_call.1} parent=1 // pred_check
      _
    $region15: #{tpu_custom_call.1} parent=1 // pred_check_branch
      %22 = sbr.rel (0) target = $region17
    $region16: #{tpu_custom_call.1} parent=1 // pred_region
      %s24 = ssub.s32 2048, 2048
      %25 = vsyncadd [#allocation3], %s24
      %s26 = sshll.u32 [#allocation2], 4
      %s27 = int_to_ptr.vmem [resolvable:$true] %s26
      %32 = dma.hbm_to_vmem [thread:$0]  %s3, 2048, %s27, [#allocation3], 128, 128, 8
    $region17: #{tpu_custom_call.1} parent=1 // pred_fallthru
      _
    // Predicated region
    $region18: #{tpu_custom_call.1} parent=1 // pred_check
      _
    $region19: #{tpu_custom_call.1} parent=1 // pred_check_branch
      %34 = sbr.rel (0) target = $region21
    $region20: #{tpu_custom_call.1} parent=1 // pred_region
      _
    $region21: #{tpu_custom_call.1} parent=1 // pred_fallthru
      _
    // Predicated region
    $region22: #{tpu_custom_call.1} parent=1 // pred_check
      _
    $region23: #{tpu_custom_call.1} parent=1 // pred_check_branch
      %36 = sbr.rel (0) target = $region25
    $region24: #{tpu_custom_call.1} parent=1 // pred_region
      %s38 = ssub.s32 2048, 2048
      %39 = vsyncadd [#allocation6], %s38
      %s40 = sshll.u32 [#allocation5], 4
      %s41 = int_to_ptr.vmem [resolvable:$true] %s40
      %46 = dma.hbm_to_vmem [thread:$0]  %s5, 2048, %s41, [#allocation6], 128, 128, 8
    $region25: #{tpu_custom_call.1} parent=1 // pred_fallthru
      _
    // Predicated region
    $region26: #{tpu_custom_call.1} parent=1 // pred_check
      _
    $region27: #{tpu_custom_call.1} parent=1 // pred_check_branch
      %48 = sbr.rel (0) target = $region29
    $region28: #{tpu_custom_call.1} parent=1 // pred_region
      _
    $region29: #{tpu_custom_call.1} parent=1 // pred_fallthru
      _
    // Predicated region
    $region30: #{tpu_custom_call.1} parent=1 // pred_check
      _
    $region31: #{tpu_custom_call.1} parent=1 // pred_check_branch
      %50 = sbr.rel (0) target = $region33
    $region32: #{tpu_custom_call.1} parent=1 // pred_region
      %51 = dma.done [#allocation3], 2048
    $region33: #{tpu_custom_call.1} parent=1 // pred_fallthru
      _
    // Predicated region
    $region34: #{tpu_custom_call.1} parent=1 // pred_check
      _
    $region35: #{tpu_custom_call.1} parent=1 // pred_check_branch
      %53 = sbr.rel (0) target = $region37
    $region36: #{tpu_custom_call.1} parent=1 // pred_region
      %54 = dma.done [#allocation6], 2048
    $region37: #{tpu_custom_call.1} parent=1 // pred_fallthru
      _
    %v55 = vld [vmem:[%s0] sm:$0xff]
    %v56 = vld [vmem:[%s0 + $0x8] sm:$0xff]
    %v57 = vld [vmem:[%s0 + $0x10] sm:$0xff]
    %v58 = vld [vmem:[%s0 + $0x18] sm:$0xff]
    %v59 = vld [vmem:[%s0 + $0x20] sm:$0xff]
    %v60 = vld [vmem:[%s0 + $0x28] sm:$0xff]
    %v61 = vld [vmem:[%s0 + $0x30] sm:$0xff]
    %v62 = vld [vmem:[%s0 + $0x38] sm:$0xff]
    %v63 = vld [vmem:[%s1] sm:$0xff]
    %v64 = vld [vmem:[%s1 + $0x8] sm:$0xff]
    %v65 = vld [vmem:[%s2] sm:$0x1]
    %v67 = vlaneseq
    %v68 = vshrl.u32 %v67, 7
    %v69 = vsub.s32 0, %v68
    %v70 = vrot.slane %v65, %v69
    %vm72 = vcmask 130048
    %v74 = vsel %vm72, %v55, 0
    %v77 = vsel %vm72, %v56, 0
    %v80 = vsel %vm72, %v57, 0
    %v83 = vsel %vm72, %v58, 0
    %v86 = vsel %vm72, %v59, 0
    %v89 = vsel %vm72, %v60, 0
    %v92 = vsel %vm72, %v61, 0
    %v95 = vsel %vm72, %v62, 0
    %97 = vmatprep.subr.mxu0 0.0
    %98 = vmatpush1.msra.mxu0 %v63
    %99 = vmatprep.subr.mxu0 0.0
    %100 = vmatpush1.msra.mxu0 %v64
    %101 = vmatprep.subr.mxu0 0.0
    %102 = vmatpush1.msra.mxu0 0.0
    %103 = vmatprep.subr.mxu0 0.0
    %104 = vmatpush1.msra.mxu0 0.0
    %105 = vmatprep.subr.mxu0 0.0
    %106 = vmatpush1.msra.mxu0 0.0
    %107 = vmatprep.subr.mxu0 0.0
    %108 = vmatpush1.msra.mxu0 0.0
    %109 = vmatprep.subr.mxu0 0.0
    %110 = vmatpush1.msra.mxu0 0.0
    %111 = vmatprep.subr.mxu0 0.0
    %112 = vmatpush1.msra.mxu0 0.0
    %113 = vmatprep.subr.mxu0 0.0
    %114 = vmatpush1.msra.mxu0 0.0
    %115 = vmatprep.subr.mxu0 0.0
    %116 = vmatpush1.msra.mxu0 0.0
    %117 = vmatprep.subr.mxu0 0.0
    %118 = vmatpush1.msra.mxu0 0.0
    %119 = vmatprep.subr.mxu0 0.0
    %120 = vmatpush1.msra.mxu0 0.0
    %121 = vmatprep.subr.mxu0 0.0
    %122 = vmatpush1.msra.mxu0 0.0
    %123 = vmatprep.subr.mxu0 0.0
    %124 = vmatpush1.msra.mxu0 0.0
    %125 = vmatprep.subr.mxu0 0.0
    %126 = vmatpush1.msra.mxu0 0.0
    %127 = vmatprep.subr.mxu0 0.0
    %128 = vmatpush1.msra.mxu0 0.0
    %129 = vmatprep.subr.mxu0 0.0
    %130 = vmatpush1.msra.mxu0 0.0
    %131 = vmatprep.subr.mxu0 0.0
    %132 = vmatpush1.msra.mxu0 0.0
    %133 = vmatprep.subr.mxu0 0.0
    %134 = vmatpush1.msra.mxu0 0.0
    %135 = vmatprep.subr.mxu0 0.0
    %136 = vmatpush1.msra.mxu0 0.0
    %137 = vmatprep.subr.mxu0 0.0
    %138 = vmatpush1.msra.mxu0 0.0
    %139 = vmatprep.subr.mxu0 0.0
    %140 = vmatpush1.msra.mxu0 0.0
    %141 = vmatprep.subr.mxu0 0.0
    %142 = vmatpush1.msra.mxu0 0.0
    %143 = vmatprep.subr.mxu0 0.0
    %144 = vmatpush1.msra.mxu0 0.0
    %145 = vmatprep.subr.mxu0 0.0
    %146 = vmatpush1.msra.mxu0 0.0
    %147 = vmatprep.subr.mxu0 0.0
    %148 = vmatpush1.msra.mxu0 0.0
    %149 = vmatprep.subr.mxu0 0.0
    %150 = vmatpush1.msra.mxu0 0.0
    %151 = vmatprep.subr.mxu0 0.0
    %152 = vmatpush1.msra.mxu0 0.0
    %153 = vmatprep.subr.mxu0 0.0
    %154 = vmatpush1.msra.mxu0 0.0
    %155 = vmatprep.subr.mxu0 0.0
    %156 = vmatpush1.msra.mxu0 0.0
    %157 = vmatprep.subr.mxu0 0.0
    %158 = vmatpush1.msra.mxu0 0.0
    %159 = vmatprep.subr.mxu0 0.0
    %160 = vmatpush1.msra.mxu0 0.0
    %161 = vmatprep.mubr.f32.mxu0 0.0
    %162 = vmatmul.mubr.f32.gmra.mrb[0].mxu0 %v74
    %v163 = vpop.f32.mrb[0].mxu0
    %v164 = vadd.f32 %v70, %v163
    %v165 = vpop.f32.mrb[0].mxu0
    %166 = vmatprep.mubr.f32.mxu0 0.0
    %167 = vmatmul.mubr.f32.gmra.mrb[0].mxu0 %v77
    %v168 = vpop.f32.mrb[0].mxu0
    %v169 = vadd.f32 %v70, %v168
    %v170 = vpop.f32.mrb[0].mxu0
    %171 = vmatprep.mubr.f32.mxu0 0.0
    %172 = vmatmul.mubr.f32.gmra.mrb[0].mxu0 %v80
    %v173 = vpop.f32.mrb[0].mxu0
    %v174 = vadd.f32 %v70, %v173
    %v175 = vpop.f32.mrb[0].mxu0
    %176 = vmatprep.mubr.f32.mxu0 0.0
    %177 = vmatmul.mubr.f32.gmra.mrb[0].mxu0 %v83
    %v178 = vpop.f32.mrb[0].mxu0
    %v179 = vadd.f32 %v70, %v178
    %v180 = vpop.f32.mrb[0].mxu0
    %181 = vmatprep.mubr.f32.mxu0 0.0
    %182 = vmatmul.mubr.f32.gmra.mrb[0].mxu0 %v86
    %v183 = vpop.f32.mrb[0].mxu0
    %v184 = vadd.f32 %v70, %v183
    %v185 = vpop.f32.mrb[0].mxu0
    %186 = vmatprep.mubr.f32.mxu0 0.0
    %187 = vmatmul.mubr.f32.gmra.mrb[0].mxu0 %v89
    %v188 = vpop.f32.mrb[0].mxu0
    %v189 = vadd.f32 %v70, %v188
    %v190 = vpop.f32.mrb[0].mxu0
    %191 = vmatprep.mubr.f32.mxu0 0.0
    %192 = vmatmul.mubr.f32.gmra.mrb[0].mxu0 %v92
    %v193 = vpop.f32.mrb[0].mxu0
    %v194 = vadd.f32 %v70, %v193
    %v195 = vpop.f32.mrb[0].mxu0
    %196 = vmatprep.mubr.f32.mxu0 0.0
    %197 = vmatmul.mubr.f32.gmra.mrb[0].mxu0 %v95
    %v198 = vpop.f32.mrb[0].mxu0
    %v199 = vadd.f32 %v70, %v198
    %v200 = vpop.f32.mrb[0].mxu0
    %201 = vdwg.mxu0
    %v202 = vmax.f32 %v164, 0.0
    %v203 = vmax.f32 %v169, 0.0
    %v204 = vmax.f32 %v174, 0.0
    %v205 = vmax.f32 %v179, 0.0
    %v206 = vmax.f32 %v184, 0.0
    %v207 = vmax.f32 %v189, 0.0
    %v208 = vmax.f32 %v194, 0.0
    %v209 = vmax.f32 %v199, 0.0
    %v210 = vld [vmem:[#allocation2] sm:$0xff]
    %v211 = vld [vmem:[#allocation2 + $0x8] sm:$0xff]
    %v212 = vld [vmem:[#allocation2 + $0x10] sm:$0xff]
    %v213 = vld [vmem:[#allocation2 + $0x18] sm:$0xff]
    %v214 = vld [vmem:[#allocation2 + $0x20] sm:$0xff]
    %v215 = vld [vmem:[#allocation2 + $0x28] sm:$0xff]
    %v216 = vld [vmem:[#allocation2 + $0x30] sm:$0xff]
    %v217 = vld [vmem:[#allocation2 + $0x38] sm:$0xff]
    %v218 = vld [vmem:[#allocation2 + $0x40] sm:$0xff]
    %v219 = vld [vmem:[#allocation2 + $0x48] sm:$0xff]
    %v220 = vld [vmem:[#allocation2 + $0x50] sm:$0xff]
    %v221 = vld [vmem:[#allocation2 + $0x58] sm:$0xff]
    %v222 = vld [vmem:[#allocation2 + $0x60] sm:$0xff]
    %v223 = vld [vmem:[#allocation2 + $0x68] sm:$0xff]
    %v224 = vld [vmem:[#allocation2 + $0x70] sm:$0xff]
    %v225 = vld [vmem:[#allocation2 + $0x78] sm:$0xff]
    %v226 = vld [vmem:[%s4] sm:$0x1]
    %v228 = vlaneseq
    %v229 = vshrl.u32 %v228, 7
    %v230 = vsub.s32 0, %v229
    %v231 = vrot.slane %v226, %v230
    %233 = vmatprep.subr.mxu0 0.0
    %234 = vmatpush1.msra.mxu0 %v210
    %235 = vmatprep.subr.mxu0 0.0
    %236 = vmatpush1.msra.mxu0 %v211
    %237 = vmatprep.subr.mxu0 0.0
    %238 = vmatpush1.msra.mxu0 %v212
    %239 = vmatprep.subr.mxu0 0.0
    %240 = vmatpush1.msra.mxu0 %v213
    %241 = vmatprep.subr.mxu0 0.0
    %242 = vmatpush1.msra.mxu0 %v214
    %243 = vmatprep.subr.mxu0 0.0
    %244 = vmatpush1.msra.mxu0 %v215
    %245 = vmatprep.subr.mxu0 0.0
    %246 = vmatpush1.msra.mxu0 %v216
    %247 = vmatprep.subr.mxu0 0.0
    %248 = vmatpush1.msra.mxu0 %v217
    %249 = vmatprep.subr.mxu0 0.0
    %250 = vmatpush1.msra.mxu0 %v218
    %251 = vmatprep.subr.mxu0 0.0
    %252 = vmatpush1.msra.mxu0 %v219
    %253 = vmatprep.subr.mxu0 0.0
    %254 = vmatpush1.msra.mxu0 %v220
    %255 = vmatprep.subr.mxu0 0.0
    %256 = vmatpush1.msra.mxu0 %v221
    %257 = vmatprep.subr.mxu0 0.0
    %258 = vmatpush1.msra.mxu0 %v222
    %259 = vmatprep.subr.mxu0 0.0
    %260 = vmatpush1.msra.mxu0 %v223
    %261 = vmatprep.subr.mxu0 0.0
    %262 = vmatpush1.msra.mxu0 %v224
    %263 = vmatprep.subr.mxu0 0.0
    %264 = vmatpush1.msra.mxu0 %v225
    %265 = vmatprep.subr.mxu0 0.0
    %266 = vmatpush1.msra.mxu0 0.0
    %267 = vmatprep.subr.mxu0 0.0
    %268 = vmatpush1.msra.mxu0 0.0
    %269 = vmatprep.subr.mxu0 0.0
    %270 = vmatpush1.msra.mxu0 0.0
    %271 = vmatprep.subr.mxu0 0.0
    %272 = vmatpush1.msra.mxu0 0.0
    %273 = vmatprep.subr.mxu0 0.0
    %274 = vmatpush1.msra.mxu0 0.0
    %275 = vmatprep.subr.mxu0 0.0
    %276 = vmatpush1.msra.mxu0 0.0
    %277 = vmatprep.subr.mxu0 0.0
    %278 = vmatpush1.msra.mxu0 0.0
    %279 = vmatprep.subr.mxu0 0.0
    %280 = vmatpush1.msra.mxu0 0.0
    %281 = vmatprep.subr.mxu0 0.0
    %282 = vmatpush1.msra.mxu0 0.0
    %283 = vmatprep.subr.mxu0 0.0
    %284 = vmatpush1.msra.mxu0 0.0
    %285 = vmatprep.subr.mxu0 0.0
    %286 = vmatpush1.msra.mxu0 0.0
    %287 = vmatprep.subr.mxu0 0.0
    %288 = vmatpush1.msra.mxu0 0.0
    %289 = vmatprep.subr.mxu0 0.0
    %290 = vmatpush1.msra.mxu0 0.0
    %291 = vmatprep.subr.mxu0 0.0
    %292 = vmatpush1.msra.mxu0 0.0
    %293 = vmatprep.subr.mxu0 0.0
    %294 = vmatpush1.msra.mxu0 0.0
    %295 = vmatprep.subr.mxu0 0.0
    %296 = vmatpush1.msra.mxu0 0.0
    %297 = vmatprep.mubr.f32.mxu0 0.0
    %298 = vmatmul.mubr.f32.gmra.mrb[0].mxu0 %v202
    %v299 = vpop.f32.mrb[0].mxu0
    %v300 = vadd.f32 %v231, %v299
    %v301 = vpop.f32.mrb[0].mxu0
    %302 = vmatprep.mubr.f32.mxu0 0.0
    %303 = vmatmul.mubr.f32.gmra.mrb[0].mxu0 %v203
    %v304 = vpop.f32.mrb[0].mxu0
    %v305 = vadd.f32 %v231, %v304
    %v306 = vpop.f32.mrb[0].mxu0
    %307 = vmatprep.mubr.f32.mxu0 0.0
    %308 = vmatmul.mubr.f32.gmra.mrb[0].mxu0 %v204
    %v309 = vpop.f32.mrb[0].mxu0
    %v310 = vadd.f32 %v231, %v309
    %v311 = vpop.f32.mrb[0].mxu0
    %312 = vmatprep.mubr.f32.mxu0 0.0
    %313 = vmatmul.mubr.f32.gmra.mrb[0].mxu0 %v205
    %v314 = vpop.f32.mrb[0].mxu0
    %v315 = vadd.f32 %v231, %v314
    %v316 = vpop.f32.mrb[0].mxu0
    %317 = vmatprep.mubr.f32.mxu0 0.0
    %318 = vmatmul.mubr.f32.gmra.mrb[0].mxu0 %v206
    %v319 = vpop.f32.mrb[0].mxu0
    %v320 = vadd.f32 %v231, %v319
    %v321 = vpop.f32.mrb[0].mxu0
    %322 = vmatprep.mubr.f32.mxu0 0.0
    %323 = vmatmul.mubr.f32.gmra.mrb[0].mxu0 %v207
    %v324 = vpop.f32.mrb[0].mxu0
    %v325 = vadd.f32 %v231, %v324
    %v326 = vpop.f32.mrb[0].mxu0
    %327 = vmatprep.mubr.f32.mxu0 0.0
    %328 = vmatmul.mubr.f32.gmra.mrb[0].mxu0 %v208
    %v329 = vpop.f32.mrb[0].mxu0
    %v330 = vadd.f32 %v231, %v329
    %v331 = vpop.f32.mrb[0].mxu0
    %332 = vmatprep.mubr.f32.mxu0 0.0
    %333 = vmatmul.mubr.f32.gmra.mrb[0].mxu0 %v209
    %v334 = vpop.f32.mrb[0].mxu0
    %v335 = vadd.f32 %v231, %v334
    %v336 = vpop.f32.mrb[0].mxu0
    %337 = vdwg.mxu0
    %v338 = vmax.f32 %v300, 0.0
    %v339 = vmax.f32 %v305, 0.0
    %v340 = vmax.f32 %v310, 0.0
    %v341 = vmax.f32 %v315, 0.0
    %v342 = vmax.f32 %v320, 0.0
    %v343 = vmax.f32 %v325, 0.0
    %v344 = vmax.f32 %v330, 0.0
    %v345 = vmax.f32 %v335, 0.0
    %v346 = vld [vmem:[#allocation5] sm:$0xff]
    %v347 = vld [vmem:[#allocation5 + $0x8] sm:$0xff]
    %v348 = vld [vmem:[#allocation5 + $0x10] sm:$0xff]
    %v349 = vld [vmem:[#allocation5 + $0x18] sm:$0xff]
    %v350 = vld [vmem:[#allocation5 + $0x20] sm:$0xff]
    %v351 = vld [vmem:[#allocation5 + $0x28] sm:$0xff]
    %v352 = vld [vmem:[#allocation5 + $0x30] sm:$0xff]
    %v353 = vld [vmem:[#allocation5 + $0x38] sm:$0xff]
    %v354 = vld [vmem:[#allocation5 + $0x40] sm:$0xff]
    %v355 = vld [vmem:[#allocation5 + $0x48] sm:$0xff]
    %v356 = vld [vmem:[#allocation5 + $0x50] sm:$0xff]
    %v357 = vld [vmem:[#allocation5 + $0x58] sm:$0xff]
    %v358 = vld [vmem:[#allocation5 + $0x60] sm:$0xff]
    %v359 = vld [vmem:[#allocation5 + $0x68] sm:$0xff]
    %v360 = vld [vmem:[#allocation5 + $0x70] sm:$0xff]
    %v361 = vld [vmem:[#allocation5 + $0x78] sm:$0xff]
    %v362 = vld [vmem:[%s6] sm:$0x1]
    %v364 = vlaneseq
    %v365 = vshrl.u32 %v364, 7
    %v366 = vsub.s32 0, %v365
    %v367 = vrot.slane %v362, %v366
    %369 = vmatprep.subr.mxu0 0.0
    %370 = vmatpush1.msra.mxu0 %v346
    %371 = vmatprep.subr.mxu0 0.0
    %372 = vmatpush1.msra.mxu0 %v347
    %373 = vmatprep.subr.mxu0 0.0
    %374 = vmatpush1.msra.mxu0 %v348
    %375 = vmatprep.subr.mxu0 0.0
    %376 = vmatpush1.msra.mxu0 %v349
    %377 = vmatprep.subr.mxu0 0.0
    %378 = vmatpush1.msra.mxu0 %v350
    %379 = vmatprep.subr.mxu0 0.0
    %380 = vmatpush1.msra.mxu0 %v351
    %381 = vmatprep.subr.mxu0 0.0
    %382 = vmatpush1.msra.mxu0 %v352
    %383 = vmatprep.subr.mxu0 0.0
    %384 = vmatpush1.msra.mxu0 %v353
    %385 = vmatprep.subr.mxu0 0.0
    %386 = vmatpush1.msra.mxu0 %v354
    %387 = vmatprep.subr.mxu0 0.0
    %388 = vmatpush1.msra.mxu0 %v355
    %389 = vmatprep.subr.mxu0 0.0
    %390 = vmatpush1.msra.mxu0 %v356
    %391 = vmatprep.subr.mxu0 0.0
    %392 = vmatpush1.msra.mxu0 %v357
    %393 = vmatprep.subr.mxu0 0.0
    %394 = vmatpush1.msra.mxu0 %v358
    %395 = vmatprep.subr.mxu0 0.0
    %396 = vmatpush1.msra.mxu0 %v359
    %397 = vmatprep.subr.mxu0 0.0
    %398 = vmatpush1.msra.mxu0 %v360
    %399 = vmatprep.subr.mxu0 0.0
    %400 = vmatpush1.msra.mxu0 %v361
    %401 = vmatprep.subr.mxu0 0.0
    %402 = vmatpush1.msra.mxu0 0.0
    %403 = vmatprep.subr.mxu0 0.0
    %404 = vmatpush1.msra.mxu0 0.0
    %405 = vmatprep.subr.mxu0 0.0
    %406 = vmatpush1.msra.mxu0 0.0
    %407 = vmatprep.subr.mxu0 0.0
    %408 = vmatpush1.msra.mxu0 0.0
    %409 = vmatprep.subr.mxu0 0.0
    %410 = vmatpush1.msra.mxu0 0.0
    %411 = vmatprep.subr.mxu0 0.0
    %412 = vmatpush1.msra.mxu0 0.0
    %413 = vmatprep.subr.mxu0 0.0
    %414 = vmatpush1.msra.mxu0 0.0
    %415 = vmatprep.subr.mxu0 0.0
    %416 = vmatpush1.msra.mxu0 0.0
    %417 = vmatprep.subr.mxu0 0.0
    %418 = vmatpush1.msra.mxu0 0.0
    %419 = vmatprep.subr.mxu0 0.0
    %420 = vmatpush1.msra.mxu0 0.0
    %421 = vmatprep.subr.mxu0 0.0
    %422 = vmatpush1.msra.mxu0 0.0
    %423 = vmatprep.subr.mxu0 0.0
    %424 = vmatpush1.msra.mxu0 0.0
    %425 = vmatprep.subr.mxu0 0.0
    %426 = vmatpush1.msra.mxu0 0.0
    %427 = vmatprep.subr.mxu0 0.0
    %428 = vmatpush1.msra.mxu0 0.0
    %429 = vmatprep.subr.mxu0 0.0
    %430 = vmatpush1.msra.mxu0 0.0
    %431 = vmatprep.subr.mxu0 0.0
    %432 = vmatpush1.msra.mxu0 0.0
    %433 = vmatprep.mubr.f32.mxu0 0.0
    %434 = vmatmul.mubr.f32.gmra.mrb[0].mxu0 %v338
    %v435 = vpop.f32.mrb[0].mxu0
    %v436 = vadd.f32 %v367, %v435
    %v437 = vpop.f32.mrb[0].mxu0
    %438 = vmatprep.mubr.f32.mxu0 0.0
    %439 = vmatmul.mubr.f32.gmra.mrb[0].mxu0 %v339
    %v440 = vpop.f32.mrb[0].mxu0
    %v441 = vadd.f32 %v367, %v440
    %v442 = vpop.f32.mrb[0].mxu0
    %443 = vmatprep.mubr.f32.mxu0 0.0
    %444 = vmatmul.mubr.f32.gmra.mrb[0].mxu0 %v340
    %v445 = vpop.f32.mrb[0].mxu0
    %v446 = vadd.f32 %v367, %v445
    %v447 = vpop.f32.mrb[0].mxu0
    %448 = vmatprep.mubr.f32.mxu0 0.0
    %449 = vmatmul.mubr.f32.gmra.mrb[0].mxu0 %v341
    %v450 = vpop.f32.mrb[0].mxu0
    %v451 = vadd.f32 %v367, %v450
    %v452 = vpop.f32.mrb[0].mxu0
    %453 = vmatprep.mubr.f32.mxu0 0.0
    %454 = vmatmul.mubr.f32.gmra.mrb[0].mxu0 %v342
    %v455 = vpop.f32.mrb[0].mxu0
    %v456 = vadd.f32 %v367, %v455
    %v457 = vpop.f32.mrb[0].mxu0
    %458 = vmatprep.mubr.f32.mxu0 0.0
    %459 = vmatmul.mubr.f32.gmra.mrb[0].mxu0 %v343
    %v460 = vpop.f32.mrb[0].mxu0
    %v461 = vadd.f32 %v367, %v460
    %v462 = vpop.f32.mrb[0].mxu0
    %463 = vmatprep.mubr.f32.mxu0 0.0
    %464 = vmatmul.mubr.f32.gmra.mrb[0].mxu0 %v344
    %v465 = vpop.f32.mrb[0].mxu0
    %v466 = vadd.f32 %v367, %v465
    %v467 = vpop.f32.mrb[0].mxu0
    %468 = vmatprep.mubr.f32.mxu0 0.0
    %469 = vmatmul.mubr.f32.gmra.mrb[0].mxu0 %v345
    %v470 = vpop.f32.mrb[0].mxu0
    %v471 = vadd.f32 %v367, %v470
    %v472 = vpop.f32.mrb[0].mxu0
    %473 = vdwg.mxu0
    %474 = vmax.xlane.f32.xlu0 %v436
    %v475 = vpop.xlane.xlu0 %474
    %476 = vmax.xlane.f32.xlu0 %v441
    %v477 = vpop.xlane.xlu0 %476
    %478 = vmax.xlane.f32.xlu0 %v446
    %v479 = vpop.xlane.xlu0 %478
    %480 = vmax.xlane.f32.xlu0 %v451
    %v481 = vpop.xlane.xlu0 %480
    %482 = vmax.xlane.f32.xlu0 %v456
    %v483 = vpop.xlane.xlu0 %482
    %484 = vmax.xlane.f32.xlu0 %v461
    %v485 = vpop.xlane.xlu0 %484
    %486 = vmax.xlane.f32.xlu0 %v466
    %v487 = vpop.xlane.xlu0 %486
    %488 = vmax.xlane.f32.xlu0 %v471
    %v489 = vpop.xlane.xlu0 %488
    %v490 = vsub.f32 %v436, %v475
    %v491 = vsub.f32 %v441, %v477
    %v492 = vsub.f32 %v446, %v479
    %v493 = vsub.f32 %v451, %v481
    %v494 = vsub.f32 %v456, %v483
    %v495 = vsub.f32 %v461, %v485
    %v496 = vsub.f32 %v466, %v487
    %v497 = vsub.f32 %v471, %v489
    %v498 = vmul.f32 %v490, 1.442695
    %v499 = vpow.pop %v498
    %v500 = vmul.f32 %v491, 1.442695
    %v501 = vpow.pop %v500
    %v502 = vmul.f32 %v492, 1.442695
    %v503 = vpow.pop %v502
    %v504 = vmul.f32 %v493, 1.442695
    %v505 = vpow.pop %v504
    %v506 = vmul.f32 %v494, 1.442695
    %v507 = vpow.pop %v506
    %v508 = vmul.f32 %v495, 1.442695
    %v509 = vpow.pop %v508
    %v510 = vmul.f32 %v496, 1.442695
    %v511 = vpow.pop %v510
    %v512 = vmul.f32 %v497, 1.442695
    %v513 = vpow.pop %v512
    %514 = vadd.xlane.f32.xlu0 %v499
    %v515 = vpop.xlane.xlu0 %514
    %516 = vadd.xlane.f32.xlu0 %v501
    %v517 = vpop.xlane.xlu0 %516
    %518 = vadd.xlane.f32.xlu0 %v503
    %v519 = vpop.xlane.xlu0 %518
    %520 = vadd.xlane.f32.xlu0 %v505
    %v521 = vpop.xlane.xlu0 %520
    %522 = vadd.xlane.f32.xlu0 %v507
    %v523 = vpop.xlane.xlu0 %522
    %524 = vadd.xlane.f32.xlu0 %v509
    %v525 = vpop.xlane.xlu0 %524
    %526 = vadd.xlane.f32.xlu0 %v511
    %v527 = vpop.xlane.xlu0 %526
    %528 = vadd.xlane.f32.xlu0 %v513
    %v529 = vpop.xlane.xlu0 %528
    %v530 = vrcp.pop %v515
    %v531 = vmul.f32 %v499, %v530
    %v532 = vrcp.pop %v517
    %v533 = vmul.f32 %v501, %v532
    %v534 = vrcp.pop %v519
    %v535 = vmul.f32 %v503, %v534
    %v536 = vrcp.pop %v521
    %v537 = vmul.f32 %v505, %v536
    %v538 = vrcp.pop %v523
    %v539 = vmul.f32 %v507, %v538
    %v540 = vrcp.pop %v525
    %v541 = vmul.f32 %v509, %v540
    %v542 = vrcp.pop %v527
    %v543 = vmul.f32 %v511, %v542
    %v544 = vrcp.pop %v529
    %v545 = vmul.f32 %v513, %v544
    %546 = vst [vmem:[#allocation7] sm:$0xff] %v531
    %547 = vst [vmem:[#allocation7 + $0x8] sm:$0xff] %v533
    %548 = vst [vmem:[#allocation7 + $0x10] sm:$0xff] %v535
    %549 = vst [vmem:[#allocation7 + $0x18] sm:$0xff] %v537
    %550 = vst [vmem:[#allocation7 + $0x20] sm:$0xff] %v539
    %551 = vst [vmem:[#allocation7 + $0x28] sm:$0xff] %v541
    %552 = vst [vmem:[#allocation7 + $0x30] sm:$0xff] %v543
    %553 = vst [vmem:[#allocation7 + $0x38] sm:$0xff] %v545
    // Predicated region
    $region38: #{tpu_custom_call.1} parent=1 // pred_check
      _
    $region39: #{tpu_custom_call.1} parent=1 // pred_check_branch
      %555 = sbr.rel (0) target = $region41
    $region40: #{tpu_custom_call.1} parent=1 // pred_region
      %s557 = ssub.s32 1024, 1024
      %558 = vsyncadd [#allocation4], %s557
      %s559 = sshll.u32 [#allocation7], 4
      %s560 = int_to_ptr.vmem [resolvable:$true] %s559
      %565 = dma.vmem_to_hbm [thread:$0]  %s560, 1024, %s7, [#allocation4], 128, 128, 8
    $region41: #{tpu_custom_call.1} parent=1 // pred_fallthru
      _
    // Predicated region
    $region42: #{tpu_custom_call.1} parent=1 // pred_check
      _
    $region43: #{tpu_custom_call.1} parent=1 // pred_check_branch
      %567 = sbr.rel (0) target = $region45
    $region44: #{tpu_custom_call.1} parent=1 // pred_region
      %568 = dma.done [#allocation4], 1024
    $region45: #{tpu_custom_call.1} parent=1 // pred_fallthru
      _
    %569 = vsyncpa [#allocation3], 1
    %570 = vsyncpa [#allocation6], 1
    %571 = vsyncpa [#allocation4], 1

</llo_original>
